<compile_context>
chip_gen: v7x
topology: tpu7x:2x2x1
jax: 0.10.0
libtpu: 0.0.40
codegen_flags: <defaults>
</compile_context>

<pallas_src>
import jax
import jax.numpy as jnp
from jax.experimental import pallas as pl
from jax.experimental.pallas import tpu as pltpu

# Parameter-slab layout (rows x 128 lanes, f32); bias stored as an extra
# column so each layer is a single augmented matmul on the MXU:
#   rows  0:16 : [w1 | b1] -> (16,  3) in cols 0:3
#   rows 16:48 : [w2 | b2] -> (32, 17) in cols 0:17
#   rows 48:50 : [w3 | b3] -> ( 2, 33) in cols 0:33
_P_ROWS = 56  # 50 used rows, padded up to a multiple of 8


def _generator_kernel(x_ref, p_ref, out_ref, xa_ref, h1_ref, h2_ref):
    tb = x_ref.shape[1]
    ones_row = jnp.ones((1, tb), jnp.float32)

    # Stage the augmented layer-1 input [x ; 1] in VMEM scratch.  The ones
    # row is re-written every grid step (one cheap row vst) so the kernel is
    # correct regardless of how the "parallel" grid is split across cores.
    xa_ref[0:2, :] = x_ref[...]
    xa_ref[2:3, :] = ones_row

    # ---- Layer 1: Linear(2 -> 16) + bias on the MXU, ReLU on the VPU ----
    h1 = jnp.dot(p_ref[0:16, 0:3], xa_ref[...],
                 preferred_element_type=jnp.float32)            # (16, TB)
    h1_ref[0:16, :] = jnp.maximum(h1, 0.0)
    h1_ref[16:17, :] = ones_row

    # ---- Layer 2: Linear(16 -> 32) + bias on the MXU, ReLU on the VPU ----
    h2 = jnp.dot(p_ref[16:48, 0:17], h1_ref[...],
                 preferred_element_type=jnp.float32)            # (32, TB)
    h2_ref[0:32, :] = jnp.maximum(h2, 0.0)
    h2_ref[32:33, :] = ones_row

    # ---- Layer 3: Linear(32 -> 2) + bias on the MXU, no activation ----
    out_ref[...] = jnp.dot(p_ref[48:50, 0:33], h2_ref[...],
                           preferred_element_type=jnp.float32
                           ).astype(out_ref.dtype)              # (2, TB)


def pack_params(params):
    """Pack (w1,b1,w2,b2,w3,b3) [PyTorch (out,in)/(out,) shapes] into one
    (56, 128) f32 slab, bias as an extra column of each weight block."""
    w1, b1, w2, b2, w3, b3 = params
    slab = jnp.zeros((_P_ROWS, 128), jnp.float32)
    slab = slab.at[0:16, 0:2].set(w1)
    slab = slab.at[0:16, 2].set(b1)
    slab = slab.at[16:48, 0:16].set(w2)
    slab = slab.at[16:48, 16].set(b2)
    slab = slab.at[48:50, 0:32].set(w3)
    slab = slab.at[48:50, 32].set(b3)
    return slab


def _pick_tile(batch, tb_max):
    """Batch tile: multiple of 128, <= tb_max, and (when the batch allows)
    small enough that the grid has >= 2 steps so the 'parallel' batch axis
    can shard across both TensorCores on v7x."""
    b128 = pl.cdiv(batch, 128) * 128
    tb = min(tb_max, b128)
    if b128 >= 256:
        tb = min(tb, (b128 // 2) // 128 * 128)
    return max(128, (tb // 128) * 128)


def generator_forward(x, param_slab, *, tb=8192):
    """x: (B, 2) float32 -> (B, 2) float32.

    tb: max batch tile (multiple of 128).  8192-32768 keeps per-grid-step
    overhead negligible while staying a few MiB of VMEM on every generation
    (scratch ~53*tb*4 bytes + double-buffered (2, tb) x/out tiles).
    A caller that already carries feature-major (2, B) activations can skip
    the wrapper's pad/transpose plumbing entirely.
    """
    B = x.shape[0]
    tb_eff = _pick_tile(B, tb)
    n_tiles = pl.cdiv(B, tb_eff)
    b_pad = n_tiles * tb_eff

    # Wrapper-side layout plumbing only: (B, 2) -> (2, B_pad), zero-padded.
    x_t = jnp.pad(x.astype(jnp.float32), ((0, b_pad - B), (0, 0))).T

    out_t = pl.pallas_call(
        _generator_kernel,
        out_shape=jax.ShapeDtypeStruct((2, b_pad), jnp.float32),
        grid_spec=pltpu.PrefetchScalarGridSpec(
            num_scalar_prefetch=0,
            grid=(n_tiles,),
            in_specs=[
                pl.BlockSpec((2, tb_eff), lambda i: (0, i)),       # x tile
                pl.BlockSpec((_P_ROWS, 128), lambda i: (0, 0)),    # resident params
            ],
            out_specs=pl.BlockSpec((2, tb_eff), lambda i: (0, i)),
            scratch_shapes=[
                pltpu.VMEM((3, tb_eff), jnp.float32),    # [x ; 1]
                pltpu.VMEM((17, tb_eff), jnp.float32),   # [relu(h1) ; 1]
                pltpu.VMEM((33, tb_eff), jnp.float32),   # [relu(h2) ; 1]
            ],
        ),
        compiler_params=pltpu.CompilerParams(
            dimension_semantics=("parallel",),
        ),
    )(x_t, param_slab)

    # Padded lanes hold relu(b1)-derived garbage; slice them off.
    return out_t[:, :B].T


def init_params(key):
    """PyTorch-style nn.Linear default init (uniform +/- 1/sqrt(fan_in)).
    Weights stored PyTorch-convention (out, in); biases (out,)."""
    dims = [(2, 16), (16, 32), (32, 2)]
    params = []
    for (fan_in, fan_out) in dims:
        key, kw, kb = jax.random.split(key, 3)
        bound = 1.0 / jnp.sqrt(fan_in)
        w = jax.random.uniform(kw, (fan_out, fan_in), jnp.float32,
                               minval=-bound, maxval=bound)
        b = jax.random.uniform(kb, (fan_out,), jnp.float32,
                               minval=-bound, maxval=bound)
        params += [w, b]
    return tuple(params)


def reference_forward(x, params):
    """Pure-JAX reference (same math as the PyTorch module), f32-exact dots."""
    w1, b1, w2, b2, w3, b3 = params
    hp = jax.lax.Precision.HIGHEST
    h = jnp.maximum(jnp.dot(x, w1.T, precision=hp) + b1, 0.0)
    h = jnp.maximum(jnp.dot(h, w2.T, precision=hp) + b2, 0.0)
    return jnp.dot(h, w3.T, precision=hp) + b3


if __name__ == "__main__":
    key = jax.random.PRNGKey(0)
    key, kx = jax.random.split(key)

    # Small demo batch; 200 exercises a 2-step grid (tile auto-clamps to 128)
    # and the pad-and-slice path for B not divisible by the tile.
    batch = 200
    x = jax.random.normal(kx, (batch, 2), jnp.float32)   # latent noise (B, 2)

    params = init_params(key)
    param_slab = pack_params(params)

    out = generator_forward(x, param_slab)
    out = jax.block_until_ready(out)

    ref = reference_forward(x, params)
    assert out.shape == (batch, 2)
    # Kernel accumulates in f32; any structural bug produces O(0.1-1) errors.
    assert jnp.allclose(out, ref, atol=1e-3, rtol=1e-3), (
        float(jnp.max(jnp.abs(out - ref))))

    print("KERNEL_OK")
</pallas_src>

<mosaic_0001>
module attributes {stable_mosaic.version = 11 : i64} {
  func.func @_generator_kernel(%arg0: i32, %arg1: memref<2x128xf32, #tpu.memory_space<vmem>>, %arg2: memref<56x128xf32, #tpu.memory_space<vmem>>, %arg3: memref<2x128xf32, #tpu.memory_space<vmem>>, %arg4: memref<3x128xf32, #tpu.memory_space<vmem>>, %arg5: memref<17x128xf32, #tpu.memory_space<vmem>>, %arg6: memref<33x128xf32, #tpu.memory_space<vmem>>) attributes {dimension_semantics = [#tpu.dimension_semantics<parallel>], iteration_bounds = array<i64: 2>, scalar_prefetch = 0 : i64, scratch_operands = 3 : i64, tpu.core_type = #tpu.core_type<tc>, window_params = [{transform_indices = @transform_0, window_bounds = array<i64: 2, 128>}, {pipeline_mode = #tpu.pipeline_mode<synchronous>, transform_indices = @transform_1, window_bounds = array<i64: 56, 128>}, {transform_indices = @transform_2, window_bounds = array<i64: 2, 128>}]} {
    %cst = arith.constant 1.000000e+00 : f32
    %0 = vector.broadcast %cst : f32 to vector<1x128xf32>
    %c0 = arith.constant 0 : index
    %c0_0 = arith.constant 0 : index
    %1 = vector.load %arg1[%c0, %c0_0] : memref<2x128xf32, #tpu.memory_space<vmem>>, vector<2x128xf32>
    %c0_1 = arith.constant 0 : index
    %c0_2 = arith.constant 0 : index
    %2 = vector.load %arg4[%c0_1, %c0_2] : memref<3x128xf32, #tpu.memory_space<vmem>>, vector<2x128xf32>
    tpu.vector_store %arg4[%c0_1, %c0_2], %1 {strides = array<i32>} : memref<3x128xf32, #tpu.memory_space<vmem>>, vector<2x128xf32>,
    %c2 = arith.constant 2 : index
    %c0_3 = arith.constant 0 : index
    %3 = vector.load %arg4[%c2, %c0_3] : memref<3x128xf32, #tpu.memory_space<vmem>>, vector<1x128xf32>
    tpu.vector_store %arg4[%c2, %c0_3], %0 {strides = array<i32>} : memref<3x128xf32, #tpu.memory_space<vmem>>, vector<1x128xf32>,
    %c0_4 = arith.constant 0 : index
    %c0_5 = arith.constant 0 : index
    %4 = vector.load %arg2[%c0_4, %c0_5] : memref<56x128xf32, #tpu.memory_space<vmem>>, vector<16x3xf32>
    %c0_6 = arith.constant 0 : index
    %c0_7 = arith.constant 0 : index
    %5 = vector.load %arg4[%c0_6, %c0_7] : memref<3x128xf32, #tpu.memory_space<vmem>>, vector<3x128xf32>
    %cst_8 = arith.constant dense<0.000000e+00> : vector<16x128xf32>
    %6 = tpu.matmul %4, %5, %cst_8 {dimension_numbers = #tpu.dot_dimension_numbers<[1], [0], [0], [1], [0, 0, 1, 1], [], []>} : vector<16x3xf32>, vector<3x128xf32>, vector<16x128xf32> -> vector<16x128xf32>
    %cst_9 = arith.constant 0.000000e+00 : f32
    %7 = vector.broadcast %cst_9 : f32 to vector<16x128xf32>
    %8 = arith.maximumf %6, %7 : vector<16x128xf32>
    %c0_10 = arith.constant 0 : index
    %c0_11 = arith.constant 0 : index
    %9 = vector.load %arg5[%c0_10, %c0_11] : memref<17x128xf32, #tpu.memory_space<vmem>>, vector<16x128xf32>
    tpu.vector_store %arg5[%c0_10, %c0_11], %8 {strides = array<i32>} : memref<17x128xf32, #tpu.memory_space<vmem>>, vector<16x128xf32>,
    %c16 = arith.constant 16 : index
    %c0_12 = arith.constant 0 : index
    %10 = vector.load %arg5[%c16, %c0_12] : memref<17x128xf32, #tpu.memory_space<vmem>>, vector<1x128xf32>
    tpu.vector_store %arg5[%c16, %c0_12], %0 {strides = array<i32>} : memref<17x128xf32, #tpu.memory_space<vmem>>, vector<1x128xf32>,
    %c16_13 = arith.constant 16 : index
    %c0_14 = arith.constant 0 : index
    %11 = vector.load %arg2[%c16_13, %c0_14] : memref<56x128xf32, #tpu.memory_space<vmem>>, vector<32x17xf32>
    %c0_15 = arith.constant 0 : index
    %c0_16 = arith.constant 0 : index
    %12 = vector.load %arg5[%c0_15, %c0_16] : memref<17x128xf32, #tpu.memory_space<vmem>>, vector<17x128xf32>
    %cst_17 = arith.constant dense<0.000000e+00> : vector<32x128xf32>
    %13 = tpu.matmul %11, %12, %cst_17 {dimension_numbers = #tpu.dot_dimension_numbers<[1], [0], [0], [1], [0, 0, 1, 1], [], []>} : vector<32x17xf32>, vector<17x128xf32>, vector<32x128xf32> -> vector<32x128xf32>
    %cst_18 = arith.constant 0.000000e+00 : f32
    %14 = vector.broadcast %cst_18 : f32 to vector<32x128xf32>
    %15 = arith.maximumf %13, %14 : vector<32x128xf32>
    %c0_19 = arith.constant 0 : index
    %c0_20 = arith.constant 0 : index
    %16 = vector.load %arg6[%c0_19, %c0_20] : memref<33x128xf32, #tpu.memory_space<vmem>>, vector<32x128xf32>
    tpu.vector_store %arg6[%c0_19, %c0_20], %15 {strides = array<i32>} : memref<33x128xf32, #tpu.memory_space<vmem>>, vector<32x128xf32>,
    %c32 = arith.constant 32 : index
    %c0_21 = arith.constant 0 : index
    %17 = vector.load %arg6[%c32, %c0_21] : memref<33x128xf32, #tpu.memory_space<vmem>>, vector<1x128xf32>
    tpu.vector_store %arg6[%c32, %c0_21], %0 {strides = array<i32>} : memref<33x128xf32, #tpu.memory_space<vmem>>, vector<1x128xf32>,
    %c48 = arith.constant 48 : index
    %c0_22 = arith.constant 0 : index
    %18 = vector.load %arg2[%c48, %c0_22] : memref<56x128xf32, #tpu.memory_space<vmem>>, vector<2x33xf32>
    %c0_23 = arith.constant 0 : index
    %c0_24 = arith.constant 0 : index
    %19 = vector.load %arg6[%c0_23, %c0_24] : memref<33x128xf32, #tpu.memory_space<vmem>>, vector<33x128xf32>
    %cst_25 = arith.constant dense<0.000000e+00> : vector<2x128xf32>
    %20 = tpu.matmul %18, %19, %cst_25 {dimension_numbers = #tpu.dot_dimension_numbers<[1], [0], [0], [1], [0, 0, 1, 1], [], []>} : vector<2x33xf32>, vector<33x128xf32>, vector<2x128xf32> -> vector<2x128xf32>
    %c0_26 = arith.constant 0 : index
    %c0_27 = arith.constant 0 : index
    %21 = vector.load %arg3[%c0_26, %c0_27] : memref<2x128xf32, #tpu.memory_space<vmem>>, vector<2x128xf32>
    tpu.vector_store %arg3[%c0_26, %c0_27], %20 {strides = array<i32>} : memref<2x128xf32, #tpu.memory_space<vmem>>, vector<2x128xf32>,
    return
  }
  func.func @transform_0(%arg0: i32) -> (i32, i32) {
    %c0_i32 = arith.constant 0 : i32
    %c0_i32_0 = arith.constant 0 : i32
    return %c0_i32, %arg0 : i32, i32
  }
  func.func @transform_1(%arg0: i32) -> (i32, i32) {
    %c0_i32 = arith.constant 0 : i32
    %c0_i32_0 = arith.constant 0 : i32
    %c0_i32_1 = arith.constant 0 : i32
    return %c0_i32, %c0_i32_0 : i32, i32
  }
  func.func @transform_2(%arg0: i32) -> (i32, i32) {
    %c0_i32 = arith.constant 0 : i32
    %c0_i32_0 = arith.constant 0 : i32
    return %c0_i32, %arg0 : i32, i32
  }
}

</mosaic_0001>

<llo_original>
// kernel: tpu_custom_call.1
$region0: #{tpu_custom_call.1}
  #allocation0 [shape = 'u32[]', space=smem, size = 0x4, offset = 0x4, fixed_abs, tag = 'smem constant byte address 0x4 - core index']
  #allocation1 [shape = 'u32[144,128]{1,0:T(1,128)}', space=vmem, size = 0x12000, scoped, tag = 'internal scratch']
  #allocation2 [shape = 'f32[3,128]{1,0:T(4,128)}', space=vmem, size = 0x800, scoped, tag = 'scratch operand']
  #allocation3 [shape = 'f32[17,128]{1,0:T(8,128)}', space=vmem, size = 0x3000, scoped, tag = 'scratch operand']
  #allocation4 [shape = 'f32[33,128]{1,0:T(8,128)}', space=vmem, size = 0x5000, scoped, tag = 'scratch operand']
  %s0 = inlined_call_operand.hbm [shape: f32[2,256], index: 0, kind: input, shape index: {}]
  %s1 = inlined_call_operand.hbm [shape: f32[56,128], index: 1, kind: input, shape index: {}]
  %s2 = inlined_call_operand.hbm [shape: f32[2,256], index: 2, kind: output, shape index: {}]
  %s3 = sld [smem:[#allocation0]]
  $region49: #{tpu_custom_call.1} parent=0
    _
  %s5 = ssub.s32 1, %s3
  %s6 = scalar_select 0, %s5, %s3
  $region1: #{tpu_custom_call.1} parent=0
    #allocation5 [shape = 'u8[2048]{0}', space=vmem, size = 0x800, scoped, tag = 'input window, operand 0']
    #allocation6 [shape = 's32[2]{0}', space=sflag, size = 0x8, scoped, tag = 'scoped memory for tpu_custom_call.1']
    #allocation7 [shape = 's32[2]{0}', space=sflag, size = 0x8, scoped, tag = 'scoped memory for tpu_custom_call.1']
    #allocation8 [shape = 'u8[28672]{0}', space=vmem, size = 0x7000, scoped, tag = 'input window, operand 1, single buffered']
    #allocation9 [shape = 's32[1]{0}', space=sflag, size = 0x4, scoped, tag = 'scoped memory for tpu_custom_call.1']
    #allocation10 [shape = 'u8[2048]{0}', space=vmem, size = 0x800, scoped, tag = 'output window, operand 0']
    %7 = vsyncpa [#allocation6], 0
    %s8 = scalar_lea.sflag [#allocation6], 1
    %9 = vsyncpa %s8, 0
    %10 = vsyncpa [#allocation9], 0
    %11 = vsyncpa [#allocation7], 0
    %s12 = scalar_lea.sflag [#allocation7], 1
    %13 = vsyncpa %s12, 0
    loop: start=0, step=1, limit=4
    $region2: #{tpu_custom_call.1} parent=1 // loop_pre_header
      _
    $region3: #{tpu_custom_call.1} parent=1 // loop_header
      %s15 = sphi 0, %s19
      %p16 = scmp.ge.s32.totalorder %s15, 4
      %s25 = sphi 0, %s27
      %s28 = sphi 0, %s25
      %s29 = sphi 0, %s28
      %s45 = sphi 0, %s29
      %s49 = sphi 0, %s49
      %s51 = sphi 0, %s49
      %s52 = sphi 0, %s51
      %s66 = sphi 0, %s52
      %s72 = sphi 0, %s74
      %s75 = sphi 0, %s72
      %s76 = sphi 0, %s75
      %s92 = sphi 0, %s76
    $region4: #{tpu_custom_call.1} parent=1 // loop_header_branch
      %18 = sbr.rel (%p16) target = $region8
    $region5: #{tpu_custom_call.1} parent=1 // loop_body
      %s20 = ssub.s32 %s15, 1
      %s21 = ssub.s32 %s15, 2
      %s22 = sadd.s32 %s15, 1
      %s23 = ssub.s32 %s15, %s22
      %p24 = scmp.eq.s32.totalorder %s23, 0
      %s26 = sadd.s32 %s25, 1
      %s27 = scalar_select %p24, %s25, %s26
      %p30 = pneg %p24
      %p31 = scmp.eq.s32.totalorder %s15, 1
      %p32 = por %p30, %p31
      %p33 = scmp.ne.s32.totalorder %s25, %s28
      %p34 = scmp.eq.s32.totalorder %s15, 0
      %p35 = por %p33, %p34
      %p36 = scmp.ne.s32.totalorder %s25, %s28
      %p37 = scmp.eq.s32.totalorder %s20, 1
      %p38 = por %p36, %p37
      %p39 = scmp.ne.s32.totalorder %s28, %s29
      %p40 = scmp.eq.s32.totalorder %s20, 0
      %p41 = por %p39, %p40
      %p42 = scmp.ne.s32.totalorder %s28, %s29
      %p43 = scmp.eq.s32.totalorder %s21, 1
      %p44 = por %p42, %p43
      %p46 = scmp.ne.s32.totalorder %s29, %s45
      %p47 = scmp.eq.s32.totalorder %s21, 0
      %p48 = por %p46, %p47
      %s50 = sadd.s32 %s49, 1
      %p53 = scmp.eq.s32.totalorder %s15, 1
      %p54 = scmp.ne.s32.totalorder %s49, %s51
      %p55 = scmp.eq.s32.totalorder %s15, 0
      %p56 = por %p54, %p55
      %p57 = scmp.ne.s32.totalorder %s49, %s51
      %p58 = scmp.eq.s32.totalorder %s20, 1
      %p59 = por %p57, %p58
      %p60 = scmp.ne.s32.totalorder %s51, %s52
      %p61 = scmp.eq.s32.totalorder %s20, 0
      %p62 = por %p60, %p61
      %p63 = scmp.ne.s32.totalorder %s51, %s52
      %p64 = scmp.eq.s32.totalorder %s21, 1
      %p65 = por %p63, %p64
      %p67 = scmp.ne.s32.totalorder %s52, %s66
      %p68 = scmp.eq.s32.totalorder %s21, 0
      %p69 = por %p67, %p68
      %s70 = ssub.s32 %s15, %s22
      %p71 = scmp.eq.s32.totalorder %s70, 0
      %s73 = sadd.s32 %s72, 1
      %s74 = scalar_select %p71, %s72, %s73
      %p77 = pneg %p71
      %p78 = scmp.eq.s32.totalorder %s15, 1
      %p79 = por %p77, %p78
      %p80 = scmp.ne.s32.totalorder %s72, %s75
      %p81 = scmp.eq.s32.totalorder %s15, 0
      %p82 = por %p80, %p81
      %p83 = scmp.ne.s32.totalorder %s72, %s75
      %p84 = scmp.eq.s32.totalorder %s20, 1
      %p85 = por %p83, %p84
      %p86 = scmp.ne.s32.totalorder %s75, %s76
      %p87 = scmp.eq.s32.totalorder %s20, 0
      %p88 = por %p86, %p87
      %p89 = scmp.ne.s32.totalorder %s75, %s76
      %p90 = scmp.eq.s32.totalorder %s21, 1
      %p91 = por %p89, %p90
      %p93 = scmp.ne.s32.totalorder %s76, %s92
      %p94 = scmp.eq.s32.totalorder %s21, 0
      %p95 = por %p93, %p94
      %p96 = scmp.le.s32.totalorder 1, %s15
      %p97 = scmp.lt.s32.totalorder %s15, 3
      %p98 = pnand %p96, %p97
      %p99 = pneg %p98
      // Predicated region
      $region9: #{tpu_custom_call.1} parent=5 // pred_check
        _
      $region10: #{tpu_custom_call.1} parent=5 // pred_check_branch
        %101 = sbr.rel (%p98) target = $region12
      $region11: #{tpu_custom_call.1} parent=5 // pred_region
        %s102 = ssub.s32 %s15, 1
        // Predicated region
        $region13: #{tpu_custom_call.1} parent=11 // pred_check
          %p103 = pneg %p62
        $region14: #{tpu_custom_call.1} parent=11 // pred_check_branch
          %105 = sbr.rel (%p103) target = $region16
        $region15: #{tpu_custom_call.1} parent=11 // pred_region
          %s107 = ssub.s32 896, 896
          %108 = vsyncadd [#allocation9], %s107
          %s109 = sshll.u32 [#allocation8], 4
          %s110 = int_to_ptr.vmem [resolvable:$true] %s109
          %115 = dma.hbm_to_vmem [thread:$0]  %s1, 896, %s110, [#allocation9], 128, 128, 8
        $region16: #{tpu_custom_call.1} parent=11 // pred_fallthru
          _
      $region12: #{tpu_custom_call.1} parent=5 // pred_fallthru
        _
      %p116 = scmp.lt.s32.totalorder %s15, 2
      // Predicated region
      $region17: #{tpu_custom_call.1} parent=5 // pred_check
        %p117 = pneg %p116
      $region18: #{tpu_custom_call.1} parent=5 // pred_check_branch
        %119 = sbr.rel (%p117) target = $region20
      $region19: #{tpu_custom_call.1} parent=5 // pred_region
        // Predicated region
        $region21: #{tpu_custom_call.1} parent=19 // pred_check
          %p120 = pneg %p35
        $region22: #{tpu_custom_call.1} parent=19 // pred_check_branch
          %122 = sbr.rel (%p120) target = $region24
        $region23: #{tpu_custom_call.1} parent=19 // pred_region
          %s123 = sand.u32 %s25, 1
          %s124 = scalar_lea.sflag [#allocation6], %s123
          %s125 = sand.u32 %s25, 1
          %s126 = smul.addr %s125, 2
          %s127 = scalar_lea.vmem [#allocation5], %s126
          %s129 = ssub.s32 32, 32
          %130 = vsyncadd %s124, %s129
          %s131 = smul.addr %s15, 32
          %s132 = scalar_lea.hbm %s0, %s131
          %s134 = sshll.u32 %s127, 4
          %s135 = int_to_ptr.vmem [resolvable:$true] %s134
          %137 = dma.hbm_to_vmem [thread:$0]  %s132, 32, %s135, %s124
        $region24: #{tpu_custom_call.1} parent=19 // pred_fallthru
          _
      $region20: #{tpu_custom_call.1} parent=5 // pred_fallthru
        _
      %p138 = scmp.le.s32.totalorder 1, %s15
      %p139 = scmp.lt.s32.totalorder %s15, 3
      %p140 = pnand %p138, %p139
      %p141 = pneg %p140
      // Predicated region
      $region25: #{tpu_custom_call.1} parent=5 // pred_check
        _
      $region26: #{tpu_custom_call.1} parent=5 // pred_check_branch
        %143 = sbr.rel (%p140) target = $region28
      $region27: #{tpu_custom_call.1} parent=5 // pred_region
        %s144 = ssub.s32 %s15, 1
        %s145 = sand.u32 %s28, 1
        %s146 = scalar_lea.sflag [#allocation6], %s145
        %s147 = sand.u32 %s28, 1
        %s148 = smul.addr %s147, 2
        %s149 = scalar_lea.vmem [#allocation5], %s148
        // Predicated region
        $region29: #{tpu_custom_call.1} parent=27 // pred_check
          %p150 = pneg %p41
        $region30: #{tpu_custom_call.1} parent=27 // pred_check_branch
          %152 = sbr.rel (%p150) target = $region32
        $region31: #{tpu_custom_call.1} parent=27 // pred_region
          %153 = dma.done %s146, 32
        $region32: #{tpu_custom_call.1} parent=27 // pred_fallthru
          _
        // Predicated region
        $region33: #{tpu_custom_call.1} parent=27 // pred_check
          %p154 = pneg %p62
        $region34: #{tpu_custom_call.1} parent=27 // pred_check_branch
          %156 = sbr.rel (%p154) target = $region36
        $region35: #{tpu_custom_call.1} parent=27 // pred_region
          %157 = dma.done [#allocation9], 896
        $region36: #{tpu_custom_call.1} parent=27 // pred_fallthru
          _
        %s158 = sand.u32 %s28, 1
        %s159 = scalar_lea.sflag [#allocation6], %s158
        %s160 = sand.u32 %s28, 1
        %s161 = smul.addr %s160, 2
        %s162 = scalar_lea.vmem [#allocation5], %s161
        %p163 = pneg %p41
        %p164 = pneg %p38
        %p165 = pneg %p62
        %p166 = pneg %p59
        %p167 = pneg %p88
        %p168 = pneg %p85
        %s169 = sand.u32 %s75, 1
        %s170 = scalar_lea.sflag [#allocation7], %s169
        %s171 = sand.u32 %s75, 1
        %s172 = smul.addr %s171, 2
        %s173 = scalar_lea.vmem [#allocation10], %s172
        %v174 = vld [vmem:[%s149] sm:$0x3]
        %175 = vst [vmem:[#allocation2] sm:$0x3] %v174
        %176 = vst [vmem:[#allocation2 + $0x2] sm:$0x1] 1.0
        %v177 = vld [vmem:[#allocation8] sm:$0xff]
        %v178 = vld [vmem:[#allocation8 + $0x8] sm:$0xff]
        %v179 = vld [vmem:[#allocation2] sm:$0x7]
        %vm180 = vcmask 23552
        %v182 = vsel %vm180, %v177, 0
        %v185 = vsel %vm180, %v178, 0
        %vm187 = vcmask 1042432
        %v189 = vsel %vm187, %v179, 0
        %191 = vmatprep.subr.mxu0 0.0
        %192 = vmatpush1.msra.mxu0 %v189
        %193 = vmatprep.subr.mxu0 0.0
        %194 = vmatpush1.msra.mxu0 0.0
        %195 = vmatprep.subr.mxu0 0.0
        %196 = vmatpush1.msra.mxu0 0.0
        %197 = vmatprep.subr.mxu0 0.0
        %198 = vmatpush1.msra.mxu0 0.0
        %199 = vmatprep.subr.mxu0 0.0
        %200 = vmatpush1.msra.mxu0 0.0
        %201 = vmatprep.subr.mxu0 0.0
        %202 = vmatpush1.msra.mxu0 0.0
        %203 = vmatprep.subr.mxu0 0.0
        %204 = vmatpush1.msra.mxu0 0.0
        %205 = vmatprep.subr.mxu0 0.0
        %206 = vmatpush1.msra.mxu0 0.0
        %207 = vmatprep.subr.mxu0 0.0
        %208 = vmatpush1.msra.mxu0 0.0
        %209 = vmatprep.subr.mxu0 0.0
        %210 = vmatpush1.msra.mxu0 0.0
        %211 = vmatprep.subr.mxu0 0.0
        %212 = vmatpush1.msra.mxu0 0.0
        %213 = vmatprep.subr.mxu0 0.0
        %214 = vmatpush1.msra.mxu0 0.0
        %215 = vmatprep.subr.mxu0 0.0
        %216 = vmatpush1.msra.mxu0 0.0
        %217 = vmatprep.subr.mxu0 0.0
        %218 = vmatpush1.msra.mxu0 0.0
        %219 = vmatprep.subr.mxu0 0.0
        %220 = vmatpush1.msra.mxu0 0.0
        %221 = vmatprep.subr.mxu0 0.0
        %222 = vmatpush1.msra.mxu0 0.0
        %223 = vmatprep.subr.mxu0 0.0
        %224 = vmatpush1.msra.mxu0 0.0
        %225 = vmatprep.subr.mxu0 0.0
        %226 = vmatpush1.msra.mxu0 0.0
        %227 = vmatprep.subr.mxu0 0.0
        %228 = vmatpush1.msra.mxu0 0.0
        %229 = vmatprep.subr.mxu0 0.0
        %230 = vmatpush1.msra.mxu0 0.0
        %231 = vmatprep.subr.mxu0 0.0
        %232 = vmatpush1.msra.mxu0 0.0
        %233 = vmatprep.subr.mxu0 0.0
        %234 = vmatpush1.msra.mxu0 0.0
        %235 = vmatprep.subr.mxu0 0.0
        %236 = vmatpush1.msra.mxu0 0.0
        %237 = vmatprep.subr.mxu0 0.0
        %238 = vmatpush1.msra.mxu0 0.0
        %239 = vmatprep.subr.mxu0 0.0
        %240 = vmatpush1.msra.mxu0 0.0
        %241 = vmatprep.subr.mxu0 0.0
        %242 = vmatpush1.msra.mxu0 0.0
        %243 = vmatprep.subr.mxu0 0.0
        %244 = vmatpush1.msra.mxu0 0.0
        %245 = vmatprep.subr.mxu0 0.0
        %246 = vmatpush1.msra.mxu0 0.0
        %247 = vmatprep.subr.mxu0 0.0
        %248 = vmatpush1.msra.mxu0 0.0
        %249 = vmatprep.subr.mxu0 0.0
        %250 = vmatpush1.msra.mxu0 0.0
        %251 = vmatprep.subr.mxu0 0.0
        %252 = vmatpush1.msra.mxu0 0.0
        %253 = vmatprep.subr.mxu0 0.0
        %254 = vmatpush1.msra.mxu0 0.0
        %255 = vmatprep.mubr.f32.mxu0 0.0
        %256 = vmatmul.mubr.f32.gmra.mrb[0].mxu0 %v182
        %v257 = vpop.f32.mrb[0].mxu0
        %v258 = vadd.f32 0.0, %v257
        %v259 = vpop.f32.mrb[0].mxu0
        %260 = vmatprep.mubr.f32.mxu0 0.0
        %261 = vmatmul.mubr.f32.gmra.mrb[0].mxu0 %v185
        %v262 = vpop.f32.mrb[0].mxu0
        %v263 = vadd.f32 0.0, %v262
        %v264 = vpop.f32.mrb[0].mxu0
        %265 = vdwg.mxu0
        %v266 = vmax.f32 %v258, 0.0
        %v267 = vmax.f32 %v263, 0.0
        %268 = vst [vmem:[#allocation3] sm:$0xff] %v266
        %269 = vst [vmem:[#allocation3 + $0x8] sm:$0xff] %v267
        %270 = vst [vmem:[#allocation3 + $0x10] sm:$0x1] 1.0
        %v271 = vld [vmem:[#allocation8 + $0x10] sm:$0xff]
        %v272 = vld [vmem:[#allocation8 + $0x18] sm:$0xff]
        %v273 = vld [vmem:[#allocation8 + $0x20] sm:$0xff]
        %v274 = vld [vmem:[#allocation8 + $0x28] sm:$0xff]
        %v275 = vld [vmem:[#allocation3] sm:$0xff]
        %v276 = vld [vmem:[#allocation3 + $0x8] sm:$0xff]
        %v277 = vld [vmem:[#allocation3 + $0x10] sm:$0x1]
        %vm278 = vcmask 138240
        %v280 = vsel %vm278, %v271, 0
        %v283 = vsel %vm278, %v272, 0
        %v286 = vsel %vm278, %v273, 0
        %v289 = vsel %vm278, %v274, 0
        %vm291 = vcmask 1040384
        %v293 = vsel %vm291, %v277, 0
        %295 = vmatprep.subr.mxu0 0.0
        %296 = vmatpush1.msra.mxu0 %v275
        %297 = vmatprep.subr.mxu0 0.0
        %298 = vmatpush1.msra.mxu0 %v276
        %299 = vmatprep.subr.mxu0 0.0
        %300 = vmatpush1.msra.mxu0 %v293
        %301 = vmatprep.subr.mxu0 0.0
        %302 = vmatpush1.msra.mxu0 0.0
        %303 = vmatprep.subr.mxu0 0.0
        %304 = vmatpush1.msra.mxu0 0.0
        %305 = vmatprep.subr.mxu0 0.0
        %306 = vmatpush1.msra.mxu0 0.0
        %307 = vmatprep.subr.mxu0 0.0
        %308 = vmatpush1.msra.mxu0 0.0
        %309 = vmatprep.subr.mxu0 0.0
        %310 = vmatpush1.msra.mxu0 0.0
        %311 = vmatprep.subr.mxu0 0.0
        %312 = vmatpush1.msra.mxu0 0.0
        %313 = vmatprep.subr.mxu0 0.0
        %314 = vmatpush1.msra.mxu0 0.0
        %315 = vmatprep.subr.mxu0 0.0
        %316 = vmatpush1.msra.mxu0 0.0
        %317 = vmatprep.subr.mxu0 0.0
        %318 = vmatpush1.msra.mxu0 0.0
        %319 = vmatprep.subr.mxu0 0.0
        %320 = vmatpush1.msra.mxu0 0.0
        %321 = vmatprep.subr.mxu0 0.0
        %322 = vmatpush1.msra.mxu0 0.0
        %323 = vmatprep.subr.mxu0 0.0
        %324 = vmatpush1.msra.mxu0 0.0
        %325 = vmatprep.subr.mxu0 0.0
        %326 = vmatpush1.msra.mxu0 0.0
        %327 = vmatprep.subr.mxu0 0.0
        %328 = vmatpush1.msra.mxu0 0.0
        %329 = vmatprep.subr.mxu0 0.0
        %330 = vmatpush1.msra.mxu0 0.0
        %331 = vmatprep.subr.mxu0 0.0
        %332 = vmatpush1.msra.mxu0 0.0
        %333 = vmatprep.subr.mxu0 0.0
        %334 = vmatpush1.msra.mxu0 0.0
        %335 = vmatprep.subr.mxu0 0.0
        %336 = vmatpush1.msra.mxu0 0.0
        %337 = vmatprep.subr.mxu0 0.0
        %338 = vmatpush1.msra.mxu0 0.0
        %339 = vmatprep.subr.mxu0 0.0
        %340 = vmatpush1.msra.mxu0 0.0
        %341 = vmatprep.subr.mxu0 0.0
        %342 = vmatpush1.msra.mxu0 0.0
        %343 = vmatprep.subr.mxu0 0.0
        %344 = vmatpush1.msra.mxu0 0.0
        %345 = vmatprep.subr.mxu0 0.0
        %346 = vmatpush1.msra.mxu0 0.0
        %347 = vmatprep.subr.mxu0 0.0
        %348 = vmatpush1.msra.mxu0 0.0
        %349 = vmatprep.subr.mxu0 0.0
        %350 = vmatpush1.msra.mxu0 0.0
        %351 = vmatprep.subr.mxu0 0.0
        %352 = vmatpush1.msra.mxu0 0.0
        %353 = vmatprep.subr.mxu0 0.0
        %354 = vmatpush1.msra.mxu0 0.0
        %355 = vmatprep.subr.mxu0 0.0
        %356 = vmatpush1.msra.mxu0 0.0
        %357 = vmatprep.subr.mxu0 0.0
        %358 = vmatpush1.msra.mxu0 0.0
        %359 = vmatprep.mubr.f32.mxu0 0.0
        %360 = vmatmul.mubr.f32.gmra.mrb[0].mxu0 %v280
        %v361 = vpop.f32.mrb[0].mxu0
        %v362 = vadd.f32 0.0, %v361
        %v363 = vpop.f32.mrb[0].mxu0
        %364 = vmatprep.mubr.f32.mxu0 0.0
        %365 = vmatmul.mubr.f32.gmra.mrb[0].mxu0 %v283
        %v366 = vpop.f32.mrb[0].mxu0
        %v367 = vadd.f32 0.0, %v366
        %v368 = vpop.f32.mrb[0].mxu0
        %369 = vmatprep.mubr.f32.mxu0 0.0
        %370 = vmatmul.mubr.f32.gmra.mrb[0].mxu0 %v286
        %v371 = vpop.f32.mrb[0].mxu0
        %v372 = vadd.f32 0.0, %v371
        %v373 = vpop.f32.mrb[0].mxu0
        %374 = vmatprep.mubr.f32.mxu0 0.0
        %375 = vmatmul.mubr.f32.gmra.mrb[0].mxu0 %v289
        %v376 = vpop.f32.mrb[0].mxu0
        %v377 = vadd.f32 0.0, %v376
        %v378 = vpop.f32.mrb[0].mxu0
        %379 = vdwg.mxu0
        %v380 = vmax.f32 %v362, 0.0
        %v381 = vmax.f32 %v367, 0.0
        %v382 = vmax.f32 %v372, 0.0
        %v383 = vmax.f32 %v377, 0.0
        %384 = vst [vmem:[#allocation4] sm:$0xff] %v380
        %385 = vst [vmem:[#allocation4 + $0x8] sm:$0xff] %v381
        %386 = vst [vmem:[#allocation4 + $0x10] sm:$0xff] %v382
        %387 = vst [vmem:[#allocation4 + $0x18] sm:$0xff] %v383
        %388 = vst [vmem:[#allocation4 + $0x20] sm:$0x1] 1.0
        %v389 = vld [vmem:[#allocation8 + $0x30] sm:$0x3]
        %v390 = vld [vmem:[#allocation4] sm:$0xff]
        %v391 = vld [vmem:[#allocation4 + $0x8] sm:$0xff]
        %v392 = vld [vmem:[#allocation4 + $0x10] sm:$0xff]
        %v393 = vld [vmem:[#allocation4 + $0x18] sm:$0xff]
        %v394 = vld [vmem:[#allocation4 + $0x20] sm:$0x1]
        %vm395 = vcmask 269312
        %v397 = vsel %vm395, %v389, 0
        %v400 = vsel %vm291, %v394, 0
        %402 = vmatprep.subr.mxu0 0.0
        %403 = vmatpush1.msra.mxu0 %v390
        %404 = vmatprep.subr.mxu0 0.0
        %405 = vmatpush1.msra.mxu0 %v391
        %406 = vmatprep.subr.mxu0 0.0
        %407 = vmatpush1.msra.mxu0 %v392
        %408 = vmatprep.subr.mxu0 0.0
        %409 = vmatpush1.msra.mxu0 %v393
        %410 = vmatprep.subr.mxu0 0.0
        %411 = vmatpush1.msra.mxu0 %v400
        %412 = vmatprep.subr.mxu0 0.0
        %413 = vmatpush1.msra.mxu0 0.0
        %414 = vmatprep.subr.mxu0 0.0
        %415 = vmatpush1.msra.mxu0 0.0
        %416 = vmatprep.subr.mxu0 0.0
        %417 = vmatpush1.msra.mxu0 0.0
        %418 = vmatprep.subr.mxu0 0.0
        %419 = vmatpush1.msra.mxu0 0.0
        %420 = vmatprep.subr.mxu0 0.0
        %421 = vmatpush1.msra.mxu0 0.0
        %422 = vmatprep.subr.mxu0 0.0
        %423 = vmatpush1.msra.mxu0 0.0
        %424 = vmatprep.subr.mxu0 0.0
        %425 = vmatpush1.msra.mxu0 0.0
        %426 = vmatprep.subr.mxu0 0.0
        %427 = vmatpush1.msra.mxu0 0.0
        %428 = vmatprep.subr.mxu0 0.0
        %429 = vmatpush1.msra.mxu0 0.0
        %430 = vmatprep.subr.mxu0 0.0
        %431 = vmatpush1.msra.mxu0 0.0
        %432 = vmatprep.subr.mxu0 0.0
        %433 = vmatpush1.msra.mxu0 0.0
        %434 = vmatprep.subr.mxu0 0.0
        %435 = vmatpush1.msra.mxu0 0.0
        %436 = vmatprep.subr.mxu0 0.0
        %437 = vmatpush1.msra.mxu0 0.0
        %438 = vmatprep.subr.mxu0 0.0
        %439 = vmatpush1.msra.mxu0 0.0
        %440 = vmatprep.subr.mxu0 0.0
        %441 = vmatpush1.msra.mxu0 0.0
        %442 = vmatprep.subr.mxu0 0.0
        %443 = vmatpush1.msra.mxu0 0.0
        %444 = vmatprep.subr.mxu0 0.0
        %445 = vmatpush1.msra.mxu0 0.0
        %446 = vmatprep.subr.mxu0 0.0
        %447 = vmatpush1.msra.mxu0 0.0
        %448 = vmatprep.subr.mxu0 0.0
        %449 = vmatpush1.msra.mxu0 0.0
        %450 = vmatprep.subr.mxu0 0.0
        %451 = vmatpush1.msra.mxu0 0.0
        %452 = vmatprep.subr.mxu0 0.0
        %453 = vmatpush1.msra.mxu0 0.0
        %454 = vmatprep.subr.mxu0 0.0
        %455 = vmatpush1.msra.mxu0 0.0
        %456 = vmatprep.subr.mxu0 0.0
        %457 = vmatpush1.msra.mxu0 0.0
        %458 = vmatprep.subr.mxu0 0.0
        %459 = vmatpush1.msra.mxu0 0.0
        %460 = vmatprep.subr.mxu0 0.0
        %461 = vmatpush1.msra.mxu0 0.0
        %462 = vmatprep.subr.mxu0 0.0
        %463 = vmatpush1.msra.mxu0 0.0
        %464 = vmatprep.subr.mxu0 0.0
        %465 = vmatpush1.msra.mxu0 0.0
        %466 = vmatprep.mubr.f32.mxu0 0.0
        %467 = vmatmul.mubr.f32.gmra.mrb[0].mxu0 %v397
        %v468 = vpop.f32.mrb[0].mxu0
        %v469 = vadd.f32 0.0, %v468
        %v470 = vpop.f32.mrb[0].mxu0
        %471 = vdwg.mxu0
        %472 = vst [vmem:[%s173] sm:$0x3] %v469
        %s473 = sand.u32 %s75, 1
        %s474 = scalar_lea.sflag [#allocation7], %s473
        %s475 = sand.u32 %s75, 1
        %s476 = smul.addr %s475, 2
        %s477 = scalar_lea.vmem [#allocation10], %s476
        // Predicated region
        $region37: #{tpu_custom_call.1} parent=27 // pred_check
          %p478 = pneg %p85
        $region38: #{tpu_custom_call.1} parent=27 // pred_check_branch
          %480 = sbr.rel (%p478) target = $region40
        $region39: #{tpu_custom_call.1} parent=27 // pred_region
          %s482 = ssub.s32 32, 32
          %483 = vsyncadd %s474, %s482
          %s484 = smul.addr %s20, 32
          %s485 = scalar_lea.hbm %s2, %s484
          %s487 = sshll.u32 %s477, 4
          %s488 = int_to_ptr.vmem [resolvable:$true] %s487
          %490 = dma.vmem_to_hbm [thread:$0]  %s488, 32, %s485, %s474
        $region40: #{tpu_custom_call.1} parent=27 // pred_fallthru
          _
      $region28: #{tpu_custom_call.1} parent=5 // pred_fallthru
        _
      %p491 = scmp.le.s32.totalorder 2, %s15
      // Predicated region
      $region41: #{tpu_custom_call.1} parent=5 // pred_check
        %p492 = pneg %p491
      $region42: #{tpu_custom_call.1} parent=5 // pred_check_branch
        %494 = sbr.rel (%p492) target = $region44
      $region43: #{tpu_custom_call.1} parent=5 // pred_region
        %s495 = ssub.s32 %s15, 2
        // Predicated region
        $region45: #{tpu_custom_call.1} parent=43 // pred_check
          %p496 = pneg %p91
        $region46: #{tpu_custom_call.1} parent=43 // pred_check_branch
          %498 = sbr.rel (%p496) target = $region48
        $region47: #{tpu_custom_call.1} parent=43 // pred_region
          %s499 = sand.u32 %s76, 1
          %s500 = scalar_lea.sflag [#allocation7], %s499
          %s501 = sand.u32 %s76, 1
          %s502 = smul.addr %s501, 2
          %s503 = scalar_lea.vmem [#allocation10], %s502
          %504 = dma.done %s500, 32
        $region48: #{tpu_custom_call.1} parent=43 // pred_fallthru
          _
      $region44: #{tpu_custom_call.1} parent=5 // pred_fallthru
        _
    $region6: #{tpu_custom_call.1} parent=1 // loop_footer
      %s19 = sadd.s32 1, %s15
    $region7: #{tpu_custom_call.1} parent=1 // loop_footer_branch
      %14 = sbr.rel target = $region3
    $region8: #{tpu_custom_call.1} parent=1 // loop_exit
      _
    %505 = vsyncpa [#allocation6], 1
    %s506 = scalar_lea.sflag [#allocation6], 1
    %507 = vsyncpa %s506, 1
    %508 = vsyncpa [#allocation9], 1
    %509 = vsyncpa [#allocation7], 1
    %s510 = scalar_lea.sflag [#allocation7], 1
    %511 = vsyncpa %s510, 1

</llo_original>
